<compile_context>
chip_gen: v7x
topology: tpu7x:2x2x1
jax: 0.10.0
libtpu: 0.0.40
codegen_flags: <defaults>
</compile_context>

<pallas_src>
import functools

import jax
import jax.numpy as jnp
from jax.experimental import pallas as pl
from jax.experimental.pallas import tpu as pltpu

_NEG_BIG = -1e30  # bias for padded classes -> exp underflows to exactly 0


def _round_up(x, m):
    return (x + m - 1) // m * m


def ensemble_kernel(x_ref, w_ref, b_ref, o_ref, *, n_models, c_pad, inv_k):
    """One grid step = one batch tile; K is fused into the matmul N dim.

    x_ref : (tB, D)          activations tile (compute dtype)
    w_ref : (D, K*C_pad)     packed, lane-dense ensemble weights
    b_ref : (1, K*C_pad)     packed biases (f32, padded classes = -1e30)
    o_ref : (tB, C_pad)      ensemble-mean probabilities (lane-dense)
    """
    # Single MXU matmul for all ensemble members, f32 accumulation.
    logits = jnp.dot(x_ref[...], w_ref[...],
                     preferred_element_type=jnp.float32) + b_ref[...]

    acc = jnp.zeros((x_ref.shape[0], c_pad), jnp.float32)
    # Static unroll over ensemble members; each slice is a 128-lane-aligned
    # (tB, C_pad) block, so no relayout copies.
    for k in range(n_models):
        lk = logits[:, k * c_pad:(k + 1) * c_pad]
        m = jnp.max(lk, axis=-1, keepdims=True)
        e = jnp.exp(lk - m)                          # padded cols -> exp(-1e30)=0
        s = jnp.sum(e, axis=-1, keepdims=True)
        # approx=True would move this to the EUP but may exceed 1e-5 tolerance.
        acc = acc + e * pl.reciprocal(s, approx=False)

    # Mean over ensemble members as a compile-time 1/K multiply.
    o_ref[...] = (acc * inv_k).astype(o_ref.dtype)


def pack_ensemble_params(weights, biases, c_pad):
    """(K, D, C_out) / (K, 1, C_out) -> lane-dense (D, K*C_pad) / (1, K*C_pad)."""
    K, D, C_out = weights.shape
    pad = c_pad - C_out
    w = jnp.pad(weights, ((0, 0), (0, 0), (0, pad)))                   # (K, D, C_pad)
    w = jnp.transpose(w, (1, 0, 2)).reshape(D, K * c_pad)              # (D, K*C_pad)
    b = jnp.pad(biases, ((0, 0), (0, 0), (0, pad)),
                constant_values=_NEG_BIG)                              # (K, 1, C_pad)
    b = jnp.transpose(b, (1, 0, 2)).reshape(1, K * c_pad)              # (1, K*C_pad)
    return w, b


def ensemble_net_forward(x_nchw, weights, biases, *, compute_dtype=None):
    """x_nchw: (B, C, H, W); weights: (K, D, C_out); biases: (K, 1, C_out)."""
    B = x_nchw.shape[0]
    K, D, C_out = weights.shape
    out_dtype = jnp.float32
    if compute_dtype is None:
        compute_dtype = x_nchw.dtype

    # Lane-dense class dimension.
    C_pad = _round_up(C_out, 128)

    # Batch: pad to sublane multiple and tile; batch-tile grid axis is
    # "parallel" so v7x's two TensorCores both get work at realistic B.
    x_flat = x_nchw.reshape(B, D).astype(compute_dtype)
    tB = min(128, _round_up(B, 8))
    B_pad = _round_up(B, tB)
    if B_pad != B:
        x_flat = jnp.pad(x_flat, ((0, B_pad - B), (0, 0)))

    # One-time parameter packing (would be precomputed in a real model).
    w_packed, b_packed = pack_ensemble_params(weights, biases, C_pad)
    w_packed = w_packed.astype(compute_dtype)
    b_packed = b_packed.astype(jnp.float32)

    kernel = functools.partial(ensemble_kernel, n_models=K, c_pad=C_pad,
                               inv_k=1.0 / K)

    grid_spec = pltpu.PrefetchScalarGridSpec(
        num_scalar_prefetch=0,
        grid=(B_pad // tB,),
        in_specs=[
            pl.BlockSpec((tB, D), lambda i: (i, 0)),            # batch tile
            pl.BlockSpec((D, K * C_pad), lambda i: (0, 0)),     # resident weights
            pl.BlockSpec((1, K * C_pad), lambda i: (0, 0)),     # resident bias row
        ],
        out_specs=pl.BlockSpec((tB, C_pad), lambda i: (i, 0)),
    )

    out_padded = pl.pallas_call(
        kernel,
        out_shape=jax.ShapeDtypeStruct((B_pad, C_pad), out_dtype),
        grid_spec=grid_spec,
        compiler_params=pltpu.CompilerParams(
            dimension_semantics=("parallel",),
            # Budget explicitly so the same tiling is safe on v7x (64 MiB VMEM).
            vmem_limit_bytes=64 * 1024 * 1024,
        ),
    )(x_flat, w_packed, b_packed)

    # TODO(synk): for realistic D (~1e4-1e5) add a D-reduction grid axis with a
    # VMEM logits accumulator; not needed at these sizes (full D fits VMEM).
    return out_padded[:B, :C_out]


def ensemble_net_reference(x_nchw, weights, biases):
    """Pure-JAX reference matching the PyTorch semantics."""
    B = x_nchw.shape[0]
    K, D, C_out = weights.shape
    x_flat = x_nchw.reshape(B, D)
    preds = []
    for k in range(K):
        logits = x_flat @ weights[k] + biases[k]          # (B, C_out)
        preds.append(jax.nn.softmax(logits, axis=1))      # softmax over classes
    pred = jnp.stack(preds, axis=1)                       # (B, K, C_out)
    return jnp.mean(pred, axis=1)                         # mean over ensemble


if __name__ == "__main__":
    key = jax.random.PRNGKey(0)
    B, C, H, W = 2, 4, 16, 16        # input image (NCHW, like PyTorch)
    K = 3                            # number of ensemble members
    C_out = 10                       # classifier classes
    D = C * H * W

    k_x, k_w, k_b = jax.random.split(key, 3)
    x = jax.random.normal(k_x, (B, C, H, W), dtype=jnp.float32)
    weights = jax.random.normal(k_w, (K, D, C_out), dtype=jnp.float32) * 0.05
    biases = jax.random.normal(k_b, (K, 1, C_out), dtype=jnp.float32) * 0.1

    ref = ensemble_net_reference(x, weights, biases)

    # f32 path: bit-for-bit-tight check against the reference.
    out = jax.block_until_ready(ensemble_net_forward(x, weights, biases))
    assert out.shape == (B, C_out)
    assert jnp.allclose(out, ref, atol=1e-5, rtol=1e-5), "f32 mismatch vs reference"

    # bf16 perf path (v6e/v7x MXU-native, half the weight HBM traffic);
    # reduced precision, checked with a correspondingly looser tolerance.
    out_bf16 = jax.block_until_ready(
        ensemble_net_forward(x, weights, biases, compute_dtype=jnp.bfloat16))
    assert out_bf16.shape == (B, C_out)
    assert jnp.allclose(out_bf16, ref, atol=2e-2), "bf16 mismatch vs reference"

    # TODO(synk): the PyTorch forward also print()s idx and x; omitted as it is
    # host-side debug I/O with no kernel equivalent.

    print("KERNEL_OK")
</pallas_src>

<mosaic_0001>
module attributes {stable_mosaic.version = 11 : i64} {
  func.func @ensemble_kernel(%arg0: i32, %arg1: memref<8x1024xf32, #tpu.memory_space<vmem>>, %arg2: memref<1024x384xf32, #tpu.memory_space<vmem>>, %arg3: memref<1x384xf32, #tpu.memory_space<vmem>>, %arg4: memref<8x128xf32, #tpu.memory_space<vmem>>) attributes {dimension_semantics = [#tpu.dimension_semantics<parallel>], iteration_bounds = array<i64: 1>, scalar_prefetch = 0 : i64, scratch_operands = 0 : i64, tpu.core_type = #tpu.core_type<tc>, window_params = [{transform_indices = @transform_0, window_bounds = array<i64: 8, 1024>}, {pipeline_mode = #tpu.pipeline_mode<synchronous>, transform_indices = @transform_1, window_bounds = array<i64: 1024, 384>}, {pipeline_mode = #tpu.pipeline_mode<synchronous>, transform_indices = @transform_2, window_bounds = array<i64: 1, 384>}, {transform_indices = @transform_3, window_bounds = array<i64: 8, 128>}]} {
    %c0 = arith.constant 0 : index
    %c0_0 = arith.constant 0 : index
    %0 = vector.load %arg1[%c0, %c0_0] : memref<8x1024xf32, #tpu.memory_space<vmem>>, vector<8x1024xf32>
    %c0_1 = arith.constant 0 : index
    %c0_2 = arith.constant 0 : index
    %1 = vector.load %arg2[%c0_1, %c0_2] : memref<1024x384xf32, #tpu.memory_space<vmem>>, vector<1024x384xf32>
    %cst = arith.constant dense<0.000000e+00> : vector<8x384xf32>
    %2 = tpu.matmul %0, %1, %cst {dimension_numbers = #tpu.dot_dimension_numbers<[1], [0], [0], [1], [0, 0, 1, 1], [], []>} : vector<8x1024xf32>, vector<1024x384xf32>, vector<8x384xf32> -> vector<8x384xf32>
    %c0_3 = arith.constant 0 : index
    %c0_4 = arith.constant 0 : index
    %3 = vector.load %arg3[%c0_3, %c0_4] : memref<1x384xf32, #tpu.memory_space<vmem>>, vector<1x384xf32>
    %4 = vector.broadcast %3 : vector<1x384xf32> to vector<8x384xf32>
    %5 = arith.addf %2, %4 : vector<8x384xf32>
    %cst_5 = arith.constant 0.000000e+00 : f32
    %6 = vector.broadcast %cst_5 : f32 to vector<8x128xf32>
    %7 = vector.extract_strided_slice %5 {offsets = [0, 0], sizes = [8, 128], strides = [1, 1]} : vector<8x384xf32> to vector<8x128xf32>
    %cst_6 = arith.constant dense<0xFF800000> : vector<8xf32>
    %8 = vector.multi_reduction <maximumf>, %7, %cst_6 [1] : vector<8x128xf32> to vector<8xf32>
    %9 = vector.shape_cast %8 : vector<8xf32> to vector<8x1xf32>
    %10 = vector.broadcast %9 : vector<8x1xf32> to vector<8x128xf32>
    %11 = arith.subf %7, %10 : vector<8x128xf32>
    %12 = math.exp %11 : vector<8x128xf32>
    %cst_7 = arith.constant dense<0.000000e+00> : vector<8xf32>
    %13 = vector.multi_reduction <add>, %12, %cst_7 [1] : vector<8x128xf32> to vector<8xf32>
    %14 = vector.shape_cast %13 : vector<8xf32> to vector<8x1xf32>
    %15 = tpu.reciprocal %14 : vector<8x1xf32> -> vector<8x1xf32>
    %16 = vector.broadcast %15 : vector<8x1xf32> to vector<8x128xf32>
    %17 = arith.mulf %12, %16 : vector<8x128xf32>
    %18 = arith.addf %6, %17 : vector<8x128xf32>
    %19 = vector.extract_strided_slice %5 {offsets = [0, 128], sizes = [8, 128], strides = [1, 1]} : vector<8x384xf32> to vector<8x128xf32>
    %cst_8 = arith.constant dense<0xFF800000> : vector<8xf32>
    %20 = vector.multi_reduction <maximumf>, %19, %cst_8 [1] : vector<8x128xf32> to vector<8xf32>
    %21 = vector.shape_cast %20 : vector<8xf32> to vector<8x1xf32>
    %22 = vector.broadcast %21 : vector<8x1xf32> to vector<8x128xf32>
    %23 = arith.subf %19, %22 : vector<8x128xf32>
    %24 = math.exp %23 : vector<8x128xf32>
    %cst_9 = arith.constant dense<0.000000e+00> : vector<8xf32>
    %25 = vector.multi_reduction <add>, %24, %cst_9 [1] : vector<8x128xf32> to vector<8xf32>
    %26 = vector.shape_cast %25 : vector<8xf32> to vector<8x1xf32>
    %27 = tpu.reciprocal %26 : vector<8x1xf32> -> vector<8x1xf32>
    %28 = vector.broadcast %27 : vector<8x1xf32> to vector<8x128xf32>
    %29 = arith.mulf %24, %28 : vector<8x128xf32>
    %30 = arith.addf %18, %29 : vector<8x128xf32>
    %31 = vector.extract_strided_slice %5 {offsets = [0, 256], sizes = [8, 128], strides = [1, 1]} : vector<8x384xf32> to vector<8x128xf32>
    %cst_10 = arith.constant dense<0xFF800000> : vector<8xf32>
    %32 = vector.multi_reduction <maximumf>, %31, %cst_10 [1] : vector<8x128xf32> to vector<8xf32>
    %33 = vector.shape_cast %32 : vector<8xf32> to vector<8x1xf32>
    %34 = vector.broadcast %33 : vector<8x1xf32> to vector<8x128xf32>
    %35 = arith.subf %31, %34 : vector<8x128xf32>
    %36 = math.exp %35 : vector<8x128xf32>
    %cst_11 = arith.constant dense<0.000000e+00> : vector<8xf32>
    %37 = vector.multi_reduction <add>, %36, %cst_11 [1] : vector<8x128xf32> to vector<8xf32>
    %38 = vector.shape_cast %37 : vector<8xf32> to vector<8x1xf32>
    %39 = tpu.reciprocal %38 : vector<8x1xf32> -> vector<8x1xf32>
    %40 = vector.broadcast %39 : vector<8x1xf32> to vector<8x128xf32>
    %41 = arith.mulf %36, %40 : vector<8x128xf32>
    %42 = arith.addf %30, %41 : vector<8x128xf32>
    %cst_12 = arith.constant 0.333333343 : f32
    %43 = vector.broadcast %cst_12 : f32 to vector<8x128xf32>
    %44 = arith.mulf %42, %43 : vector<8x128xf32>
    %c0_13 = arith.constant 0 : index
    %c0_14 = arith.constant 0 : index
    %45 = vector.load %arg4[%c0_13, %c0_14] : memref<8x128xf32, #tpu.memory_space<vmem>>, vector<8x128xf32>
    tpu.vector_store %arg4[%c0_13, %c0_14], %44 {strides = array<i32>} : memref<8x128xf32, #tpu.memory_space<vmem>>, vector<8x128xf32>,
    return
  }
  func.func @transform_0(%arg0: i32) -> (i32, i32) {
    %c0_i32 = arith.constant 0 : i32
    %c0_i32_0 = arith.constant 0 : i32
    return %arg0, %c0_i32 : i32, i32
  }
  func.func @transform_1(%arg0: i32) -> (i32, i32) {
    %c0_i32 = arith.constant 0 : i32
    %c0_i32_0 = arith.constant 0 : i32
    %c0_i32_1 = arith.constant 0 : i32
    return %c0_i32, %c0_i32_0 : i32, i32
  }
  func.func @transform_2(%arg0: i32) -> (i32, i32) {
    %c0_i32 = arith.constant 0 : i32
    %c0_i32_0 = arith.constant 0 : i32
    %c0_i32_1 = arith.constant 0 : i32
    return %c0_i32, %c0_i32_0 : i32, i32
  }
  func.func @transform_3(%arg0: i32) -> (i32, i32) {
    %c0_i32 = arith.constant 0 : i32
    %c0_i32_0 = arith.constant 0 : i32
    return %arg0, %c0_i32 : i32, i32
  }
}

</mosaic_0001>

<llo_original>
// kernel: tpu_custom_call.1
$region0: #{tpu_custom_call.1}
  #allocation0 [shape = 'u32[]', space=smem, size = 0x4, offset = 0x4, fixed_abs, tag = 'smem constant byte address 0x4 - core index']
  #allocation1 [shape = 'u32[144,128]{1,0:T(1,128)}', space=vmem, size = 0x12000, scoped, tag = 'internal scratch']
  %s0 = inlined_call_operand.hbm [shape: f32[8,1024], index: 0, kind: input, shape index: {}]
  %s1 = inlined_call_operand.hbm [shape: f32[1024,384], index: 1, kind: input, shape index: {}]
  %s2 = inlined_call_operand.hbm [shape: f32[1,384], index: 2, kind: input, shape index: {}]
  %s3 = inlined_call_operand.hbm [shape: f32[8,128], index: 3, kind: output, shape index: {}]
  %s4 = sld [smem:[#allocation0]]
  $region34: #{tpu_custom_call.1} parent=0
    _
  %s6 = ssub.s32 1, %s4
  %s7 = scalar_select 0, %s6, %s4
  $region1: #{tpu_custom_call.1} parent=0
    #allocation2 [shape = 'u8[32768]{0}', space=vmem, size = 0x8000, scoped, tag = 'input window, operand 0, single buffered']
    #allocation3 [shape = 's32[1]{0}', space=sflag, size = 0x4, scoped, tag = 'scoped memory for tpu_custom_call.1']
    #allocation4 [shape = 's32[1]{0}', space=sflag, size = 0x4, scoped, tag = 'scoped memory for tpu_custom_call.1']
    #allocation5 [shape = 'u8[1572864]{0}', space=vmem, size = 0x180000, scoped, tag = 'input window, operand 1, single buffered']
    #allocation6 [shape = 's32[1]{0}', space=sflag, size = 0x4, scoped, tag = 'scoped memory for tpu_custom_call.1']
    #allocation7 [shape = 'u8[1536]{0}', space=vmem, size = 0x800, scoped, tag = 'input window, operand 2, single buffered']
    #allocation8 [shape = 'u8[4096]{0}', space=vmem, size = 0x1000, scoped, tag = 'output window, operand 0, single buffered']
    %8 = vsyncpa [#allocation3], 0
    %9 = vsyncpa [#allocation6], 0
    %10 = vsyncpa [#allocation4], 0
    // Predicated region
    $region2: #{tpu_custom_call.1} parent=1 // pred_check
      _
    $region3: #{tpu_custom_call.1} parent=1 // pred_check_branch
      %12 = sbr.rel (0) target = $region5
    $region4: #{tpu_custom_call.1} parent=1 // pred_region
      %s14 = ssub.s32 1024, 1024
      %15 = vsyncadd [#allocation3], %s14
      %s17 = sshll.u32 [#allocation2], 4
      %s18 = int_to_ptr.vmem [resolvable:$true] %s17
      %20 = dma.hbm_to_vmem [thread:$0]  %s0, 1024, %s18, [#allocation3]
    $region5: #{tpu_custom_call.1} parent=1 // pred_fallthru
      _
    // Predicated region
    $region6: #{tpu_custom_call.1} parent=1 // pred_check
      _
    $region7: #{tpu_custom_call.1} parent=1 // pred_check_branch
      %22 = sbr.rel (0) target = $region9
    $region8: #{tpu_custom_call.1} parent=1 // pred_region
      %s24 = ssub.s32 49152, 49152
      %25 = vsyncadd [#allocation6], %s24
      %s26 = sshll.u32 [#allocation5], 4
      %s27 = int_to_ptr.vmem [resolvable:$true] %s26
      %32 = dma.hbm_to_vmem [thread:$0]  %s1, 49152, %s27, [#allocation6], 384, 384, 24
    $region9: #{tpu_custom_call.1} parent=1 // pred_fallthru
      _
    // Predicated region
    $region10: #{tpu_custom_call.1} parent=1 // pred_check
      _
    $region11: #{tpu_custom_call.1} parent=1 // pred_check_branch
      %34 = sbr.rel (0) target = $region13
    $region12: #{tpu_custom_call.1} parent=1 // pred_region
      %s36 = ssub.s32 48, 48
      %37 = vsyncadd [#allocation6], %s36
      %s39 = sshll.u32 [#allocation7], 4
      %s40 = int_to_ptr.vmem [resolvable:$true] %s39
      %42 = dma.hbm_to_vmem [thread:$0]  %s2, 48, %s40, [#allocation6]
    $region13: #{tpu_custom_call.1} parent=1 // pred_fallthru
      _
    // Predicated region
    $region14: #{tpu_custom_call.1} parent=1 // pred_check
      _
    $region15: #{tpu_custom_call.1} parent=1 // pred_check_branch
      %44 = sbr.rel (0) target = $region17
    $region16: #{tpu_custom_call.1} parent=1 // pred_region
      %45 = dma.done [#allocation3], 1024
    $region17: #{tpu_custom_call.1} parent=1 // pred_fallthru
      _
    // Predicated region
    $region18: #{tpu_custom_call.1} parent=1 // pred_check
      _
    $region19: #{tpu_custom_call.1} parent=1 // pred_check_branch
      %47 = sbr.rel (0) target = $region21
    $region20: #{tpu_custom_call.1} parent=1 // pred_region
      %48 = dma.done [#allocation6], 49152
    $region21: #{tpu_custom_call.1} parent=1 // pred_fallthru
      _
    // Predicated region
    $region22: #{tpu_custom_call.1} parent=1 // pred_check
      _
    $region23: #{tpu_custom_call.1} parent=1 // pred_check_branch
      %50 = sbr.rel (0) target = $region25
    $region24: #{tpu_custom_call.1} parent=1 // pred_region
      %51 = dma.done [#allocation6], 48
    $region25: #{tpu_custom_call.1} parent=1 // pred_fallthru
      _
    %v52 = vld [vmem:[#allocation2] sm:$0xff]
    %v53 = vld [vmem:[#allocation2 + $0x8] sm:$0xff]
    %v54 = vld [vmem:[#allocation2 + $0x10] sm:$0xff]
    %v55 = vld [vmem:[#allocation2 + $0x18] sm:$0xff]
    %v56 = vld [vmem:[#allocation2 + $0x20] sm:$0xff]
    %v57 = vld [vmem:[#allocation2 + $0x28] sm:$0xff]
    %v58 = vld [vmem:[#allocation2 + $0x30] sm:$0xff]
    %v59 = vld [vmem:[#allocation2 + $0x38] sm:$0xff]
    %v60 = vld [vmem:[#allocation5] sm:$0xff]
    %v61 = vld [vmem:[#allocation5 + $0x8] sm:$0xff]
    %v62 = vld [vmem:[#allocation5 + $0x10] sm:$0xff]
    %v63 = vld [vmem:[#allocation5 + $0x18] sm:$0xff]
    %v64 = vld [vmem:[#allocation5 + $0x20] sm:$0xff]
    %v65 = vld [vmem:[#allocation5 + $0x28] sm:$0xff]
    %v66 = vld [vmem:[#allocation5 + $0x30] sm:$0xff]
    %v67 = vld [vmem:[#allocation5 + $0x38] sm:$0xff]
    %v68 = vld [vmem:[#allocation5 + $0x40] sm:$0xff]
    %v69 = vld [vmem:[#allocation5 + $0x48] sm:$0xff]
    %v70 = vld [vmem:[#allocation5 + $0x50] sm:$0xff]
    %v71 = vld [vmem:[#allocation5 + $0x58] sm:$0xff]
    %v72 = vld [vmem:[#allocation5 + $0x60] sm:$0xff]
    %v73 = vld [vmem:[#allocation5 + $0x68] sm:$0xff]
    %v74 = vld [vmem:[#allocation5 + $0x70] sm:$0xff]
    %v75 = vld [vmem:[#allocation5 + $0x78] sm:$0xff]
    %v76 = vld [vmem:[#allocation5 + $0x80] sm:$0xff]
    %v77 = vld [vmem:[#allocation5 + $0x88] sm:$0xff]
    %v78 = vld [vmem:[#allocation5 + $0x90] sm:$0xff]
    %v79 = vld [vmem:[#allocation5 + $0x98] sm:$0xff]
    %v80 = vld [vmem:[#allocation5 + $0xa0] sm:$0xff]
    %v81 = vld [vmem:[#allocation5 + $0xa8] sm:$0xff]
    %v82 = vld [vmem:[#allocation5 + $0xb0] sm:$0xff]
    %v83 = vld [vmem:[#allocation5 + $0xb8] sm:$0xff]
    %v84 = vld [vmem:[#allocation5 + $0xc0] sm:$0xff]
    %v85 = vld [vmem:[#allocation5 + $0xc8] sm:$0xff]
    %v86 = vld [vmem:[#allocation5 + $0xd0] sm:$0xff]
    %v87 = vld [vmem:[#allocation5 + $0xd8] sm:$0xff]
    %v88 = vld [vmem:[#allocation5 + $0xe0] sm:$0xff]
    %v89 = vld [vmem:[#allocation5 + $0xe8] sm:$0xff]
    %v90 = vld [vmem:[#allocation5 + $0xf0] sm:$0xff]
    %v91 = vld [vmem:[#allocation5 + $0xf8] sm:$0xff]
    %v92 = vld [vmem:[#allocation5 + $0x100] sm:$0xff]
    %v93 = vld [vmem:[#allocation5 + $0x108] sm:$0xff]
    %v94 = vld [vmem:[#allocation5 + $0x110] sm:$0xff]
    %v95 = vld [vmem:[#allocation5 + $0x118] sm:$0xff]
    %v96 = vld [vmem:[#allocation5 + $0x120] sm:$0xff]
    %v97 = vld [vmem:[#allocation5 + $0x128] sm:$0xff]
    %v98 = vld [vmem:[#allocation5 + $0x130] sm:$0xff]
    %v99 = vld [vmem:[#allocation5 + $0x138] sm:$0xff]
    %v100 = vld [vmem:[#allocation5 + $0x140] sm:$0xff]
    %v101 = vld [vmem:[#allocation5 + $0x148] sm:$0xff]
    %v102 = vld [vmem:[#allocation5 + $0x150] sm:$0xff]
    %v103 = vld [vmem:[#allocation5 + $0x158] sm:$0xff]
    %v104 = vld [vmem:[#allocation5 + $0x160] sm:$0xff]
    %v105 = vld [vmem:[#allocation5 + $0x168] sm:$0xff]
    %v106 = vld [vmem:[#allocation5 + $0x170] sm:$0xff]
    %v107 = vld [vmem:[#allocation5 + $0x178] sm:$0xff]
    %v108 = vld [vmem:[#allocation5 + $0x180] sm:$0xff]
    %v109 = vld [vmem:[#allocation5 + $0x188] sm:$0xff]
    %v110 = vld [vmem:[#allocation5 + $0x190] sm:$0xff]
    %v111 = vld [vmem:[#allocation5 + $0x198] sm:$0xff]
    %v112 = vld [vmem:[#allocation5 + $0x1a0] sm:$0xff]
    %v113 = vld [vmem:[#allocation5 + $0x1a8] sm:$0xff]
    %v114 = vld [vmem:[#allocation5 + $0x1b0] sm:$0xff]
    %v115 = vld [vmem:[#allocation5 + $0x1b8] sm:$0xff]
    %v116 = vld [vmem:[#allocation5 + $0x1c0] sm:$0xff]
    %v117 = vld [vmem:[#allocation5 + $0x1c8] sm:$0xff]
    %v118 = vld [vmem:[#allocation5 + $0x1d0] sm:$0xff]
    %v119 = vld [vmem:[#allocation5 + $0x1d8] sm:$0xff]
    %v120 = vld [vmem:[#allocation5 + $0x1e0] sm:$0xff]
    %v121 = vld [vmem:[#allocation5 + $0x1e8] sm:$0xff]
    %v122 = vld [vmem:[#allocation5 + $0x1f0] sm:$0xff]
    %v123 = vld [vmem:[#allocation5 + $0x1f8] sm:$0xff]
    %v124 = vld [vmem:[#allocation5 + $0x200] sm:$0xff]
    %v125 = vld [vmem:[#allocation5 + $0x208] sm:$0xff]
    %v126 = vld [vmem:[#allocation5 + $0x210] sm:$0xff]
    %v127 = vld [vmem:[#allocation5 + $0x218] sm:$0xff]
    %v128 = vld [vmem:[#allocation5 + $0x220] sm:$0xff]
    %v129 = vld [vmem:[#allocation5 + $0x228] sm:$0xff]
    %v130 = vld [vmem:[#allocation5 + $0x230] sm:$0xff]
    %v131 = vld [vmem:[#allocation5 + $0x238] sm:$0xff]
    %v132 = vld [vmem:[#allocation5 + $0x240] sm:$0xff]
    %v133 = vld [vmem:[#allocation5 + $0x248] sm:$0xff]
    %v134 = vld [vmem:[#allocation5 + $0x250] sm:$0xff]
    %v135 = vld [vmem:[#allocation5 + $0x258] sm:$0xff]
    %v136 = vld [vmem:[#allocation5 + $0x260] sm:$0xff]
    %v137 = vld [vmem:[#allocation5 + $0x268] sm:$0xff]
    %v138 = vld [vmem:[#allocation5 + $0x270] sm:$0xff]
    %v139 = vld [vmem:[#allocation5 + $0x278] sm:$0xff]
    %v140 = vld [vmem:[#allocation5 + $0x280] sm:$0xff]
    %v141 = vld [vmem:[#allocation5 + $0x288] sm:$0xff]
    %v142 = vld [vmem:[#allocation5 + $0x290] sm:$0xff]
    %v143 = vld [vmem:[#allocation5 + $0x298] sm:$0xff]
    %v144 = vld [vmem:[#allocation5 + $0x2a0] sm:$0xff]
    %v145 = vld [vmem:[#allocation5 + $0x2a8] sm:$0xff]
    %v146 = vld [vmem:[#allocation5 + $0x2b0] sm:$0xff]
    %v147 = vld [vmem:[#allocation5 + $0x2b8] sm:$0xff]
    %v148 = vld [vmem:[#allocation5 + $0x2c0] sm:$0xff]
    %v149 = vld [vmem:[#allocation5 + $0x2c8] sm:$0xff]
    %v150 = vld [vmem:[#allocation5 + $0x2d0] sm:$0xff]
    %v151 = vld [vmem:[#allocation5 + $0x2d8] sm:$0xff]
    %v152 = vld [vmem:[#allocation5 + $0x2e0] sm:$0xff]
    %v153 = vld [vmem:[#allocation5 + $0x2e8] sm:$0xff]
    %v154 = vld [vmem:[#allocation5 + $0x2f0] sm:$0xff]
    %v155 = vld [vmem:[#allocation5 + $0x2f8] sm:$0xff]
    %v156 = vld [vmem:[#allocation5 + $0x300] sm:$0xff]
    %v157 = vld [vmem:[#allocation5 + $0x308] sm:$0xff]
    %v158 = vld [vmem:[#allocation5 + $0x310] sm:$0xff]
    %v159 = vld [vmem:[#allocation5 + $0x318] sm:$0xff]
    %v160 = vld [vmem:[#allocation5 + $0x320] sm:$0xff]
    %v161 = vld [vmem:[#allocation5 + $0x328] sm:$0xff]
    %v162 = vld [vmem:[#allocation5 + $0x330] sm:$0xff]
    %v163 = vld [vmem:[#allocation5 + $0x338] sm:$0xff]
    %v164 = vld [vmem:[#allocation5 + $0x340] sm:$0xff]
    %v165 = vld [vmem:[#allocation5 + $0x348] sm:$0xff]
    %v166 = vld [vmem:[#allocation5 + $0x350] sm:$0xff]
    %v167 = vld [vmem:[#allocation5 + $0x358] sm:$0xff]
    %v168 = vld [vmem:[#allocation5 + $0x360] sm:$0xff]
    %v169 = vld [vmem:[#allocation5 + $0x368] sm:$0xff]
    %v170 = vld [vmem:[#allocation5 + $0x370] sm:$0xff]
    %v171 = vld [vmem:[#allocation5 + $0x378] sm:$0xff]
    %v172 = vld [vmem:[#allocation5 + $0x380] sm:$0xff]
    %v173 = vld [vmem:[#allocation5 + $0x388] sm:$0xff]
    %v174 = vld [vmem:[#allocation5 + $0x390] sm:$0xff]
    %v175 = vld [vmem:[#allocation5 + $0x398] sm:$0xff]
    %v176 = vld [vmem:[#allocation5 + $0x3a0] sm:$0xff]
    %v177 = vld [vmem:[#allocation5 + $0x3a8] sm:$0xff]
    %v178 = vld [vmem:[#allocation5 + $0x3b0] sm:$0xff]
    %v179 = vld [vmem:[#allocation5 + $0x3b8] sm:$0xff]
    %v180 = vld [vmem:[#allocation5 + $0x3c0] sm:$0xff]
    %v181 = vld [vmem:[#allocation5 + $0x3c8] sm:$0xff]
    %v182 = vld [vmem:[#allocation5 + $0x3d0] sm:$0xff]
    %v183 = vld [vmem:[#allocation5 + $0x3d8] sm:$0xff]
    %v184 = vld [vmem:[#allocation5 + $0x3e0] sm:$0xff]
    %v185 = vld [vmem:[#allocation5 + $0x3e8] sm:$0xff]
    %v186 = vld [vmem:[#allocation5 + $0x3f0] sm:$0xff]
    %v187 = vld [vmem:[#allocation5 + $0x3f8] sm:$0xff]
    %v188 = vld [vmem:[#allocation5 + $0x400] sm:$0xff]
    %v189 = vld [vmem:[#allocation5 + $0x408] sm:$0xff]
    %v190 = vld [vmem:[#allocation5 + $0x410] sm:$0xff]
    %v191 = vld [vmem:[#allocation5 + $0x418] sm:$0xff]
    %v192 = vld [vmem:[#allocation5 + $0x420] sm:$0xff]
    %v193 = vld [vmem:[#allocation5 + $0x428] sm:$0xff]
    %v194 = vld [vmem:[#allocation5 + $0x430] sm:$0xff]
    %v195 = vld [vmem:[#allocation5 + $0x438] sm:$0xff]
    %v196 = vld [vmem:[#allocation5 + $0x440] sm:$0xff]
    %v197 = vld [vmem:[#allocation5 + $0x448] sm:$0xff]
    %v198 = vld [vmem:[#allocation5 + $0x450] sm:$0xff]
    %v199 = vld [vmem:[#allocation5 + $0x458] sm:$0xff]
    %v200 = vld [vmem:[#allocation5 + $0x460] sm:$0xff]
    %v201 = vld [vmem:[#allocation5 + $0x468] sm:$0xff]
    %v202 = vld [vmem:[#allocation5 + $0x470] sm:$0xff]
    %v203 = vld [vmem:[#allocation5 + $0x478] sm:$0xff]
    %v204 = vld [vmem:[#allocation5 + $0x480] sm:$0xff]
    %v205 = vld [vmem:[#allocation5 + $0x488] sm:$0xff]
    %v206 = vld [vmem:[#allocation5 + $0x490] sm:$0xff]
    %v207 = vld [vmem:[#allocation5 + $0x498] sm:$0xff]
    %v208 = vld [vmem:[#allocation5 + $0x4a0] sm:$0xff]
    %v209 = vld [vmem:[#allocation5 + $0x4a8] sm:$0xff]
    %v210 = vld [vmem:[#allocation5 + $0x4b0] sm:$0xff]
    %v211 = vld [vmem:[#allocation5 + $0x4b8] sm:$0xff]
    %v212 = vld [vmem:[#allocation5 + $0x4c0] sm:$0xff]
    %v213 = vld [vmem:[#allocation5 + $0x4c8] sm:$0xff]
    %v214 = vld [vmem:[#allocation5 + $0x4d0] sm:$0xff]
    %v215 = vld [vmem:[#allocation5 + $0x4d8] sm:$0xff]
    %v216 = vld [vmem:[#allocation5 + $0x4e0] sm:$0xff]
    %v217 = vld [vmem:[#allocation5 + $0x4e8] sm:$0xff]
    %v218 = vld [vmem:[#allocation5 + $0x4f0] sm:$0xff]
    %v219 = vld [vmem:[#allocation5 + $0x4f8] sm:$0xff]
    %v220 = vld [vmem:[#allocation5 + $0x500] sm:$0xff]
    %v221 = vld [vmem:[#allocation5 + $0x508] sm:$0xff]
    %v222 = vld [vmem:[#allocation5 + $0x510] sm:$0xff]
    %v223 = vld [vmem:[#allocation5 + $0x518] sm:$0xff]
    %v224 = vld [vmem:[#allocation5 + $0x520] sm:$0xff]
    %v225 = vld [vmem:[#allocation5 + $0x528] sm:$0xff]
    %v226 = vld [vmem:[#allocation5 + $0x530] sm:$0xff]
    %v227 = vld [vmem:[#allocation5 + $0x538] sm:$0xff]
    %v228 = vld [vmem:[#allocation5 + $0x540] sm:$0xff]
    %v229 = vld [vmem:[#allocation5 + $0x548] sm:$0xff]
    %v230 = vld [vmem:[#allocation5 + $0x550] sm:$0xff]
    %v231 = vld [vmem:[#allocation5 + $0x558] sm:$0xff]
    %v232 = vld [vmem:[#allocation5 + $0x560] sm:$0xff]
    %v233 = vld [vmem:[#allocation5 + $0x568] sm:$0xff]
    %v234 = vld [vmem:[#allocation5 + $0x570] sm:$0xff]
    %v235 = vld [vmem:[#allocation5 + $0x578] sm:$0xff]
    %v236 = vld [vmem:[#allocation5 + $0x580] sm:$0xff]
    %v237 = vld [vmem:[#allocation5 + $0x588] sm:$0xff]
    %v238 = vld [vmem:[#allocation5 + $0x590] sm:$0xff]
    %v239 = vld [vmem:[#allocation5 + $0x598] sm:$0xff]
    %v240 = vld [vmem:[#allocation5 + $0x5a0] sm:$0xff]
    %v241 = vld [vmem:[#allocation5 + $0x5a8] sm:$0xff]
    %v242 = vld [vmem:[#allocation5 + $0x5b0] sm:$0xff]
    %v243 = vld [vmem:[#allocation5 + $0x5b8] sm:$0xff]
    %v244 = vld [vmem:[#allocation5 + $0x5c0] sm:$0xff]
    %v245 = vld [vmem:[#allocation5 + $0x5c8] sm:$0xff]
    %v246 = vld [vmem:[#allocation5 + $0x5d0] sm:$0xff]
    %v247 = vld [vmem:[#allocation5 + $0x5d8] sm:$0xff]
    %v248 = vld [vmem:[#allocation5 + $0x5e0] sm:$0xff]
    %v249 = vld [vmem:[#allocation5 + $0x5e8] sm:$0xff]
    %v250 = vld [vmem:[#allocation5 + $0x5f0] sm:$0xff]
    %v251 = vld [vmem:[#allocation5 + $0x5f8] sm:$0xff]
    %v252 = vld [vmem:[#allocation5 + $0x600] sm:$0xff]
    %v253 = vld [vmem:[#allocation5 + $0x608] sm:$0xff]
    %v254 = vld [vmem:[#allocation5 + $0x610] sm:$0xff]
    %v255 = vld [vmem:[#allocation5 + $0x618] sm:$0xff]
    %v256 = vld [vmem:[#allocation5 + $0x620] sm:$0xff]
    %v257 = vld [vmem:[#allocation5 + $0x628] sm:$0xff]
    %v258 = vld [vmem:[#allocation5 + $0x630] sm:$0xff]
    %v259 = vld [vmem:[#allocation5 + $0x638] sm:$0xff]
    %v260 = vld [vmem:[#allocation5 + $0x640] sm:$0xff]
    %v261 = vld [vmem:[#allocation5 + $0x648] sm:$0xff]
    %v262 = vld [vmem:[#allocation5 + $0x650] sm:$0xff]
    %v263 = vld [vmem:[#allocation5 + $0x658] sm:$0xff]
    %v264 = vld [vmem:[#allocation5 + $0x660] sm:$0xff]
    %v265 = vld [vmem:[#allocation5 + $0x668] sm:$0xff]
    %v266 = vld [vmem:[#allocation5 + $0x670] sm:$0xff]
    %v267 = vld [vmem:[#allocation5 + $0x678] sm:$0xff]
    %v268 = vld [vmem:[#allocation5 + $0x680] sm:$0xff]
    %v269 = vld [vmem:[#allocation5 + $0x688] sm:$0xff]
    %v270 = vld [vmem:[#allocation5 + $0x690] sm:$0xff]
    %v271 = vld [vmem:[#allocation5 + $0x698] sm:$0xff]
    %v272 = vld [vmem:[#allocation5 + $0x6a0] sm:$0xff]
    %v273 = vld [vmem:[#allocation5 + $0x6a8] sm:$0xff]
    %v274 = vld [vmem:[#allocation5 + $0x6b0] sm:$0xff]
    %v275 = vld [vmem:[#allocation5 + $0x6b8] sm:$0xff]
    %v276 = vld [vmem:[#allocation5 + $0x6c0] sm:$0xff]
    %v277 = vld [vmem:[#allocation5 + $0x6c8] sm:$0xff]
    %v278 = vld [vmem:[#allocation5 + $0x6d0] sm:$0xff]
    %v279 = vld [vmem:[#allocation5 + $0x6d8] sm:$0xff]
    %v280 = vld [vmem:[#allocation5 + $0x6e0] sm:$0xff]
    %v281 = vld [vmem:[#allocation5 + $0x6e8] sm:$0xff]
    %v282 = vld [vmem:[#allocation5 + $0x6f0] sm:$0xff]
    %v283 = vld [vmem:[#allocation5 + $0x6f8] sm:$0xff]
    %v284 = vld [vmem:[#allocation5 + $0x700] sm:$0xff]
    %v285 = vld [vmem:[#allocation5 + $0x708] sm:$0xff]
    %v286 = vld [vmem:[#allocation5 + $0x710] sm:$0xff]
    %v287 = vld [vmem:[#allocation5 + $0x718] sm:$0xff]
    %v288 = vld [vmem:[#allocation5 + $0x720] sm:$0xff]
    %v289 = vld [vmem:[#allocation5 + $0x728] sm:$0xff]
    %v290 = vld [vmem:[#allocation5 + $0x730] sm:$0xff]
    %v291 = vld [vmem:[#allocation5 + $0x738] sm:$0xff]
    %v292 = vld [vmem:[#allocation5 + $0x740] sm:$0xff]
    %v293 = vld [vmem:[#allocation5 + $0x748] sm:$0xff]
    %v294 = vld [vmem:[#allocation5 + $0x750] sm:$0xff]
    %v295 = vld [vmem:[#allocation5 + $0x758] sm:$0xff]
    %v296 = vld [vmem:[#allocation5 + $0x760] sm:$0xff]
    %v297 = vld [vmem:[#allocation5 + $0x768] sm:$0xff]
    %v298 = vld [vmem:[#allocation5 + $0x770] sm:$0xff]
    %v299 = vld [vmem:[#allocation5 + $0x778] sm:$0xff]
    %v300 = vld [vmem:[#allocation5 + $0x780] sm:$0xff]
    %v301 = vld [vmem:[#allocation5 + $0x788] sm:$0xff]
    %v302 = vld [vmem:[#allocation5 + $0x790] sm:$0xff]
    %v303 = vld [vmem:[#allocation5 + $0x798] sm:$0xff]
    %v304 = vld [vmem:[#allocation5 + $0x7a0] sm:$0xff]
    %v305 = vld [vmem:[#allocation5 + $0x7a8] sm:$0xff]
    %v306 = vld [vmem:[#allocation5 + $0x7b0] sm:$0xff]
    %v307 = vld [vmem:[#allocation5 + $0x7b8] sm:$0xff]
    %v308 = vld [vmem:[#allocation5 + $0x7c0] sm:$0xff]
    %v309 = vld [vmem:[#allocation5 + $0x7c8] sm:$0xff]
    %v310 = vld [vmem:[#allocation5 + $0x7d0] sm:$0xff]
    %v311 = vld [vmem:[#allocation5 + $0x7d8] sm:$0xff]
    %v312 = vld [vmem:[#allocation5 + $0x7e0] sm:$0xff]
    %v313 = vld [vmem:[#allocation5 + $0x7e8] sm:$0xff]
    %v314 = vld [vmem:[#allocation5 + $0x7f0] sm:$0xff]
    %v315 = vld [vmem:[#allocation5 + $0x7f8] sm:$0xff]
    %v316 = vld [vmem:[#allocation5 + $0x800] sm:$0xff]
    %v317 = vld [vmem:[#allocation5 + $0x808] sm:$0xff]
    %v318 = vld [vmem:[#allocation5 + $0x810] sm:$0xff]
    %v319 = vld [vmem:[#allocation5 + $0x818] sm:$0xff]
    %v320 = vld [vmem:[#allocation5 + $0x820] sm:$0xff]
    %v321 = vld [vmem:[#allocation5 + $0x828] sm:$0xff]
    %v322 = vld [vmem:[#allocation5 + $0x830] sm:$0xff]
    %v323 = vld [vmem:[#allocation5 + $0x838] sm:$0xff]
    %v324 = vld [vmem:[#allocation5 + $0x840] sm:$0xff]
    %v325 = vld [vmem:[#allocation5 + $0x848] sm:$0xff]
    %v326 = vld [vmem:[#allocation5 + $0x850] sm:$0xff]
    %v327 = vld [vmem:[#allocation5 + $0x858] sm:$0xff]
    %v328 = vld [vmem:[#allocation5 + $0x860] sm:$0xff]
    %v329 = vld [vmem:[#allocation5 + $0x868] sm:$0xff]
    %v330 = vld [vmem:[#allocation5 + $0x870] sm:$0xff]
    %v331 = vld [vmem:[#allocation5 + $0x878] sm:$0xff]
    %v332 = vld [vmem:[#allocation5 + $0x880] sm:$0xff]
    %v333 = vld [vmem:[#allocation5 + $0x888] sm:$0xff]
    %v334 = vld [vmem:[#allocation5 + $0x890] sm:$0xff]
    %v335 = vld [vmem:[#allocation5 + $0x898] sm:$0xff]
    %v336 = vld [vmem:[#allocation5 + $0x8a0] sm:$0xff]
    %v337 = vld [vmem:[#allocation5 + $0x8a8] sm:$0xff]
    %v338 = vld [vmem:[#allocation5 + $0x8b0] sm:$0xff]
    %v339 = vld [vmem:[#allocation5 + $0x8b8] sm:$0xff]
    %v340 = vld [vmem:[#allocation5 + $0x8c0] sm:$0xff]
    %v341 = vld [vmem:[#allocation5 + $0x8c8] sm:$0xff]
    %v342 = vld [vmem:[#allocation5 + $0x8d0] sm:$0xff]
    %v343 = vld [vmem:[#allocation5 + $0x8d8] sm:$0xff]
    %v344 = vld [vmem:[#allocation5 + $0x8e0] sm:$0xff]
    %v345 = vld [vmem:[#allocation5 + $0x8e8] sm:$0xff]
    %v346 = vld [vmem:[#allocation5 + $0x8f0] sm:$0xff]
    %v347 = vld [vmem:[#allocation5 + $0x8f8] sm:$0xff]
    %v348 = vld [vmem:[#allocation5 + $0x900] sm:$0xff]
    %v349 = vld [vmem:[#allocation5 + $0x908] sm:$0xff]
    %v350 = vld [vmem:[#allocation5 + $0x910] sm:$0xff]
    %v351 = vld [vmem:[#allocation5 + $0x918] sm:$0xff]
    %v352 = vld [vmem:[#allocation5 + $0x920] sm:$0xff]
    %v353 = vld [vmem:[#allocation5 + $0x928] sm:$0xff]
    %v354 = vld [vmem:[#allocation5 + $0x930] sm:$0xff]
    %v355 = vld [vmem:[#allocation5 + $0x938] sm:$0xff]
    %v356 = vld [vmem:[#allocation5 + $0x940] sm:$0xff]
    %v357 = vld [vmem:[#allocation5 + $0x948] sm:$0xff]
    %v358 = vld [vmem:[#allocation5 + $0x950] sm:$0xff]
    %v359 = vld [vmem:[#allocation5 + $0x958] sm:$0xff]
    %v360 = vld [vmem:[#allocation5 + $0x960] sm:$0xff]
    %v361 = vld [vmem:[#allocation5 + $0x968] sm:$0xff]
    %v362 = vld [vmem:[#allocation5 + $0x970] sm:$0xff]
    %v363 = vld [vmem:[#allocation5 + $0x978] sm:$0xff]
    %v364 = vld [vmem:[#allocation5 + $0x980] sm:$0xff]
    %v365 = vld [vmem:[#allocation5 + $0x988] sm:$0xff]
    %v366 = vld [vmem:[#allocation5 + $0x990] sm:$0xff]
    %v367 = vld [vmem:[#allocation5 + $0x998] sm:$0xff]
    %v368 = vld [vmem:[#allocation5 + $0x9a0] sm:$0xff]
    %v369 = vld [vmem:[#allocation5 + $0x9a8] sm:$0xff]
    %v370 = vld [vmem:[#allocation5 + $0x9b0] sm:$0xff]
    %v371 = vld [vmem:[#allocation5 + $0x9b8] sm:$0xff]
    %v372 = vld [vmem:[#allocation5 + $0x9c0] sm:$0xff]
    %v373 = vld [vmem:[#allocation5 + $0x9c8] sm:$0xff]
    %v374 = vld [vmem:[#allocation5 + $0x9d0] sm:$0xff]
    %v375 = vld [vmem:[#allocation5 + $0x9d8] sm:$0xff]
    %v376 = vld [vmem:[#allocation5 + $0x9e0] sm:$0xff]
    %v377 = vld [vmem:[#allocation5 + $0x9e8] sm:$0xff]
    %v378 = vld [vmem:[#allocation5 + $0x9f0] sm:$0xff]
    %v379 = vld [vmem:[#allocation5 + $0x9f8] sm:$0xff]
    %v380 = vld [vmem:[#allocation5 + $0xa00] sm:$0xff]
    %v381 = vld [vmem:[#allocation5 + $0xa08] sm:$0xff]
    %v382 = vld [vmem:[#allocation5 + $0xa10] sm:$0xff]
    %v383 = vld [vmem:[#allocation5 + $0xa18] sm:$0xff]
    %v384 = vld [vmem:[#allocation5 + $0xa20] sm:$0xff]
    %v385 = vld [vmem:[#allocation5 + $0xa28] sm:$0xff]
    %v386 = vld [vmem:[#allocation5 + $0xa30] sm:$0xff]
    %v387 = vld [vmem:[#allocation5 + $0xa38] sm:$0xff]
    %v388 = vld [vmem:[#allocation5 + $0xa40] sm:$0xff]
    %v389 = vld [vmem:[#allocation5 + $0xa48] sm:$0xff]
    %v390 = vld [vmem:[#allocation5 + $0xa50] sm:$0xff]
    %v391 = vld [vmem:[#allocation5 + $0xa58] sm:$0xff]
    %v392 = vld [vmem:[#allocation5 + $0xa60] sm:$0xff]
    %v393 = vld [vmem:[#allocation5 + $0xa68] sm:$0xff]
    %v394 = vld [vmem:[#allocation5 + $0xa70] sm:$0xff]
    %v395 = vld [vmem:[#allocation5 + $0xa78] sm:$0xff]
    %v396 = vld [vmem:[#allocation5 + $0xa80] sm:$0xff]
    %v397 = vld [vmem:[#allocation5 + $0xa88] sm:$0xff]
    %v398 = vld [vmem:[#allocation5 + $0xa90] sm:$0xff]
    %v399 = vld [vmem:[#allocation5 + $0xa98] sm:$0xff]
    %v400 = vld [vmem:[#allocation5 + $0xaa0] sm:$0xff]
    %v401 = vld [vmem:[#allocation5 + $0xaa8] sm:$0xff]
    %v402 = vld [vmem:[#allocation5 + $0xab0] sm:$0xff]
    %v403 = vld [vmem:[#allocation5 + $0xab8] sm:$0xff]
    %v404 = vld [vmem:[#allocation5 + $0xac0] sm:$0xff]
    %v405 = vld [vmem:[#allocation5 + $0xac8] sm:$0xff]
    %v406 = vld [vmem:[#allocation5 + $0xad0] sm:$0xff]
    %v407 = vld [vmem:[#allocation5 + $0xad8] sm:$0xff]
    %v408 = vld [vmem:[#allocation5 + $0xae0] sm:$0xff]
    %v409 = vld [vmem:[#allocation5 + $0xae8] sm:$0xff]
    %v410 = vld [vmem:[#allocation5 + $0xaf0] sm:$0xff]
    %v411 = vld [vmem:[#allocation5 + $0xaf8] sm:$0xff]
    %v412 = vld [vmem:[#allocation5 + $0xb00] sm:$0xff]
    %v413 = vld [vmem:[#allocation5 + $0xb08] sm:$0xff]
    %v414 = vld [vmem:[#allocation5 + $0xb10] sm:$0xff]
    %v415 = vld [vmem:[#allocation5 + $0xb18] sm:$0xff]
    %v416 = vld [vmem:[#allocation5 + $0xb20] sm:$0xff]
    %v417 = vld [vmem:[#allocation5 + $0xb28] sm:$0xff]
    %v418 = vld [vmem:[#allocation5 + $0xb30] sm:$0xff]
    %v419 = vld [vmem:[#allocation5 + $0xb38] sm:$0xff]
    %v420 = vld [vmem:[#allocation5 + $0xb40] sm:$0xff]
    %v421 = vld [vmem:[#allocation5 + $0xb48] sm:$0xff]
    %v422 = vld [vmem:[#allocation5 + $0xb50] sm:$0xff]
    %v423 = vld [vmem:[#allocation5 + $0xb58] sm:$0xff]
    %v424 = vld [vmem:[#allocation5 + $0xb60] sm:$0xff]
    %v425 = vld [vmem:[#allocation5 + $0xb68] sm:$0xff]
    %v426 = vld [vmem:[#allocation5 + $0xb70] sm:$0xff]
    %v427 = vld [vmem:[#allocation5 + $0xb78] sm:$0xff]
    %v428 = vld [vmem:[#allocation5 + $0xb80] sm:$0xff]
    %v429 = vld [vmem:[#allocation5 + $0xb88] sm:$0xff]
    %v430 = vld [vmem:[#allocation5 + $0xb90] sm:$0xff]
    %v431 = vld [vmem:[#allocation5 + $0xb98] sm:$0xff]
    %v432 = vld [vmem:[#allocation5 + $0xba0] sm:$0xff]
    %v433 = vld [vmem:[#allocation5 + $0xba8] sm:$0xff]
    %v434 = vld [vmem:[#allocation5 + $0xbb0] sm:$0xff]
    %v435 = vld [vmem:[#allocation5 + $0xbb8] sm:$0xff]
    %v436 = vld [vmem:[#allocation5 + $0xbc0] sm:$0xff]
    %v437 = vld [vmem:[#allocation5 + $0xbc8] sm:$0xff]
    %v438 = vld [vmem:[#allocation5 + $0xbd0] sm:$0xff]
    %v439 = vld [vmem:[#allocation5 + $0xbd8] sm:$0xff]
    %v440 = vld [vmem:[#allocation5 + $0xbe0] sm:$0xff]
    %v441 = vld [vmem:[#allocation5 + $0xbe8] sm:$0xff]
    %v442 = vld [vmem:[#allocation5 + $0xbf0] sm:$0xff]
    %v443 = vld [vmem:[#allocation5 + $0xbf8] sm:$0xff]
    %v444 = vld [vmem:[#allocation7] sm:$0x7]
    %v446 = vlaneseq
    %v447 = vshrl.u32 %v446, 7
    %v448 = vsub.s32 0, %v447
    %v449 = vrot.slane %v444, %v448
    %v450 = vlaneseq
    %v451 = vshrl.u32 %v450, 7
    %v452 = vsub.s32 1, %v451
    %v453 = vrot.slane %v444, %v452
    %v454 = vlaneseq
    %v455 = vshrl.u32 %v454, 7
    %v456 = vsub.s32 2, %v455
    %v457 = vrot.slane %v444, %v456
    %461 = vmatprep.subr.mxu0 %v61
    %462 = vmatpush1.msra.mxu0 %v60
    %463 = vmatprep.subr.mxu0 %v64
    %464 = vmatpush1.msra.mxu0 %v63
    %465 = vmatprep.subr.mxu0 %v67
    %466 = vmatpush1.msra.mxu0 %v66
    %467 = vmatprep.subr.mxu0 %v70
    %468 = vmatpush1.msra.mxu0 %v69
    %469 = vmatprep.subr.mxu0 %v73
    %470 = vmatpush1.msra.mxu0 %v72
    %471 = vmatprep.subr.mxu0 %v76
    %472 = vmatpush1.msra.mxu0 %v75
    %473 = vmatprep.subr.mxu0 %v79
    %474 = vmatpush1.msra.mxu0 %v78
    %475 = vmatprep.subr.mxu0 %v82
    %476 = vmatpush1.msra.mxu0 %v81
    %477 = vmatprep.subr.mxu0 %v85
    %478 = vmatpush1.msra.mxu0 %v84
    %479 = vmatprep.subr.mxu0 %v88
    %480 = vmatpush1.msra.mxu0 %v87
    %481 = vmatprep.subr.mxu0 %v91
    %482 = vmatpush1.msra.mxu0 %v90
    %483 = vmatprep.subr.mxu0 %v94
    %484 = vmatpush1.msra.mxu0 %v93
    %485 = vmatprep.subr.mxu0 %v97
    %486 = vmatpush1.msra.mxu0 %v96
    %487 = vmatprep.subr.mxu0 %v100
    %488 = vmatpush1.msra.mxu0 %v99
    %489 = vmatprep.subr.mxu0 %v103
    %490 = vmatpush1.msra.mxu0 %v102
    %491 = vmatprep.subr.mxu0 %v106
    %492 = vmatpush1.msra.mxu0 %v105
    %493 = vmatprep.subr.mxu0 %v109
    %494 = vmatpush1.msra.mxu0 %v108
    %495 = vmatprep.subr.mxu0 %v112
    %496 = vmatpush1.msra.mxu0 %v111
    %497 = vmatprep.subr.mxu0 %v115
    %498 = vmatpush1.msra.mxu0 %v114
    %499 = vmatprep.subr.mxu0 %v118
    %500 = vmatpush1.msra.mxu0 %v117
    %501 = vmatprep.subr.mxu0 %v121
    %502 = vmatpush1.msra.mxu0 %v120
    %503 = vmatprep.subr.mxu0 %v124
    %504 = vmatpush1.msra.mxu0 %v123
    %505 = vmatprep.subr.mxu0 %v127
    %506 = vmatpush1.msra.mxu0 %v126
    %507 = vmatprep.subr.mxu0 %v130
    %508 = vmatpush1.msra.mxu0 %v129
    %509 = vmatprep.subr.mxu0 %v133
    %510 = vmatpush1.msra.mxu0 %v132
    %511 = vmatprep.subr.mxu0 %v136
    %512 = vmatpush1.msra.mxu0 %v135
    %513 = vmatprep.subr.mxu0 %v139
    %514 = vmatpush1.msra.mxu0 %v138
    %515 = vmatprep.subr.mxu0 %v142
    %516 = vmatpush1.msra.mxu0 %v141
    %517 = vmatprep.subr.mxu0 %v145
    %518 = vmatpush1.msra.mxu0 %v144
    %519 = vmatprep.subr.mxu0 %v148
    %520 = vmatpush1.msra.mxu0 %v147
    %521 = vmatprep.subr.mxu0 %v151
    %522 = vmatpush1.msra.mxu0 %v150
    %523 = vmatprep.subr.mxu0 %v154
    %524 = vmatpush1.msra.mxu0 %v153
    %525 = vmatprep.mubr.f32.mxu0 %v53
    %526 = vmatmul.mubr.f32.gmra.mrb[0].mxu0 %v52
    %v527 = vpop.f32.mrb[0].mxu0
    %v528 = vadd.f32 %v449, %v527
    %v529 = vpop.f32.mrb[0].mxu0
    %v530 = vadd.f32 %v453, %v529
    %531 = vdwg.mxu0
    %532 = vmatprep.subr.mxu0 %v157
    %533 = vmatpush1.msra.mxu0 %v156
    %534 = vmatprep.subr.mxu0 %v160
    %535 = vmatpush1.msra.mxu0 %v159
    %536 = vmatprep.subr.mxu0 %v163
    %537 = vmatpush1.msra.mxu0 %v162
    %538 = vmatprep.subr.mxu0 %v166
    %539 = vmatpush1.msra.mxu0 %v165
    %540 = vmatprep.subr.mxu0 %v169
    %541 = vmatpush1.msra.mxu0 %v168
    %542 = vmatprep.subr.mxu0 %v172
    %543 = vmatpush1.msra.mxu0 %v171
    %544 = vmatprep.subr.mxu0 %v175
    %545 = vmatpush1.msra.mxu0 %v174
    %546 = vmatprep.subr.mxu0 %v178
    %547 = vmatpush1.msra.mxu0 %v177
    %548 = vmatprep.subr.mxu0 %v181
    %549 = vmatpush1.msra.mxu0 %v180
    %550 = vmatprep.subr.mxu0 %v184
    %551 = vmatpush1.msra.mxu0 %v183
    %552 = vmatprep.subr.mxu0 %v187
    %553 = vmatpush1.msra.mxu0 %v186
    %554 = vmatprep.subr.mxu0 %v190
    %555 = vmatpush1.msra.mxu0 %v189
    %556 = vmatprep.subr.mxu0 %v193
    %557 = vmatpush1.msra.mxu0 %v192
    %558 = vmatprep.subr.mxu0 %v196
    %559 = vmatpush1.msra.mxu0 %v195
    %560 = vmatprep.subr.mxu0 %v199
    %561 = vmatpush1.msra.mxu0 %v198
    %562 = vmatprep.subr.mxu0 %v202
    %563 = vmatpush1.msra.mxu0 %v201
    %564 = vmatprep.subr.mxu0 %v205
    %565 = vmatpush1.msra.mxu0 %v204
    %566 = vmatprep.subr.mxu0 %v208
    %567 = vmatpush1.msra.mxu0 %v207
    %568 = vmatprep.subr.mxu0 %v211
    %569 = vmatpush1.msra.mxu0 %v210
    %570 = vmatprep.subr.mxu0 %v214
    %571 = vmatpush1.msra.mxu0 %v213
    %572 = vmatprep.subr.mxu0 %v217
    %573 = vmatpush1.msra.mxu0 %v216
    %574 = vmatprep.subr.mxu0 %v220
    %575 = vmatpush1.msra.mxu0 %v219
    %576 = vmatprep.subr.mxu0 %v223
    %577 = vmatpush1.msra.mxu0 %v222
    %578 = vmatprep.subr.mxu0 %v226
    %579 = vmatpush1.msra.mxu0 %v225
    %580 = vmatprep.subr.mxu0 %v229
    %581 = vmatpush1.msra.mxu0 %v228
    %582 = vmatprep.subr.mxu0 %v232
    %583 = vmatpush1.msra.mxu0 %v231
    %584 = vmatprep.subr.mxu0 %v235
    %585 = vmatpush1.msra.mxu0 %v234
    %586 = vmatprep.subr.mxu0 %v238
    %587 = vmatpush1.msra.mxu0 %v237
    %588 = vmatprep.subr.mxu0 %v241
    %589 = vmatpush1.msra.mxu0 %v240
    %590 = vmatprep.subr.mxu0 %v244
    %591 = vmatpush1.msra.mxu0 %v243
    %592 = vmatprep.subr.mxu0 %v247
    %593 = vmatpush1.msra.mxu0 %v246
    %594 = vmatprep.subr.mxu0 %v250
    %595 = vmatpush1.msra.mxu0 %v249
    %596 = vmatprep.mubr.f32.mxu0 %v55
    %597 = vmatmul.mubr.f32.gmra.mrb[0].mxu0 %v54
    %v598 = vpop.f32.mrb[0].mxu0
    %v599 = vadd.f32 %v528, %v598
    %v600 = vpop.f32.mrb[0].mxu0
    %v601 = vadd.f32 %v530, %v600
    %602 = vdwg.mxu0
    %603 = vmatprep.subr.mxu0 %v253
    %604 = vmatpush1.msra.mxu0 %v252
    %605 = vmatprep.subr.mxu0 %v256
    %606 = vmatpush1.msra.mxu0 %v255
    %607 = vmatprep.subr.mxu0 %v259
    %608 = vmatpush1.msra.mxu0 %v258
    %609 = vmatprep.subr.mxu0 %v262
    %610 = vmatpush1.msra.mxu0 %v261
    %611 = vmatprep.subr.mxu0 %v265
    %612 = vmatpush1.msra.mxu0 %v264
    %613 = vmatprep.subr.mxu0 %v268
    %614 = vmatpush1.msra.mxu0 %v267
    %615 = vmatprep.subr.mxu0 %v271
    %616 = vmatpush1.msra.mxu0 %v270
    %617 = vmatprep.subr.mxu0 %v274
    %618 = vmatpush1.msra.mxu0 %v273
    %619 = vmatprep.subr.mxu0 %v277
    %620 = vmatpush1.msra.mxu0 %v276
    %621 = vmatprep.subr.mxu0 %v280
    %622 = vmatpush1.msra.mxu0 %v279
    %623 = vmatprep.subr.mxu0 %v283
    %624 = vmatpush1.msra.mxu0 %v282
    %625 = vmatprep.subr.mxu0 %v286
    %626 = vmatpush1.msra.mxu0 %v285
    %627 = vmatprep.subr.mxu0 %v289
    %628 = vmatpush1.msra.mxu0 %v288
    %629 = vmatprep.subr.mxu0 %v292
    %630 = vmatpush1.msra.mxu0 %v291
    %631 = vmatprep.subr.mxu0 %v295
    %632 = vmatpush1.msra.mxu0 %v294
    %633 = vmatprep.subr.mxu0 %v298
    %634 = vmatpush1.msra.mxu0 %v297
    %635 = vmatprep.subr.mxu0 %v301
    %636 = vmatpush1.msra.mxu0 %v300
    %637 = vmatprep.subr.mxu0 %v304
    %638 = vmatpush1.msra.mxu0 %v303
    %639 = vmatprep.subr.mxu0 %v307
    %640 = vmatpush1.msra.mxu0 %v306
    %641 = vmatprep.subr.mxu0 %v310
    %642 = vmatpush1.msra.mxu0 %v309
    %643 = vmatprep.subr.mxu0 %v313
    %644 = vmatpush1.msra.mxu0 %v312
    %645 = vmatprep.subr.mxu0 %v316
    %646 = vmatpush1.msra.mxu0 %v315
    %647 = vmatprep.subr.mxu0 %v319
    %648 = vmatpush1.msra.mxu0 %v318
    %649 = vmatprep.subr.mxu0 %v322
    %650 = vmatpush1.msra.mxu0 %v321
    %651 = vmatprep.subr.mxu0 %v325
    %652 = vmatpush1.msra.mxu0 %v324
    %653 = vmatprep.subr.mxu0 %v328
    %654 = vmatpush1.msra.mxu0 %v327
    %655 = vmatprep.subr.mxu0 %v331
    %656 = vmatpush1.msra.mxu0 %v330
    %657 = vmatprep.subr.mxu0 %v334
    %658 = vmatpush1.msra.mxu0 %v333
    %659 = vmatprep.subr.mxu0 %v337
    %660 = vmatpush1.msra.mxu0 %v336
    %661 = vmatprep.subr.mxu0 %v340
    %662 = vmatpush1.msra.mxu0 %v339
    %663 = vmatprep.subr.mxu0 %v343
    %664 = vmatpush1.msra.mxu0 %v342
    %665 = vmatprep.subr.mxu0 %v346
    %666 = vmatpush1.msra.mxu0 %v345
    %667 = vmatprep.mubr.f32.mxu0 %v57
    %668 = vmatmul.mubr.f32.gmra.mrb[0].mxu0 %v56
    %v669 = vpop.f32.mrb[0].mxu0
    %v670 = vadd.f32 %v599, %v669
    %v671 = vpop.f32.mrb[0].mxu0
    %v672 = vadd.f32 %v601, %v671
    %673 = vdwg.mxu0
    %674 = vmatprep.subr.mxu0 %v349
    %675 = vmatpush1.msra.mxu0 %v348
    %676 = vmatprep.subr.mxu0 %v352
    %677 = vmatpush1.msra.mxu0 %v351
    %678 = vmatprep.subr.mxu0 %v355
    %679 = vmatpush1.msra.mxu0 %v354
    %680 = vmatprep.subr.mxu0 %v358
    %681 = vmatpush1.msra.mxu0 %v357
    %682 = vmatprep.subr.mxu0 %v361
    %683 = vmatpush1.msra.mxu0 %v360
    %684 = vmatprep.subr.mxu0 %v364
    %685 = vmatpush1.msra.mxu0 %v363
    %686 = vmatprep.subr.mxu0 %v367
    %687 = vmatpush1.msra.mxu0 %v366
    %688 = vmatprep.subr.mxu0 %v370
    %689 = vmatpush1.msra.mxu0 %v369
    %690 = vmatprep.subr.mxu0 %v373
    %691 = vmatpush1.msra.mxu0 %v372
    %692 = vmatprep.subr.mxu0 %v376
    %693 = vmatpush1.msra.mxu0 %v375
    %694 = vmatprep.subr.mxu0 %v379
    %695 = vmatpush1.msra.mxu0 %v378
    %696 = vmatprep.subr.mxu0 %v382
    %697 = vmatpush1.msra.mxu0 %v381
    %698 = vmatprep.subr.mxu0 %v385
    %699 = vmatpush1.msra.mxu0 %v384
    %700 = vmatprep.subr.mxu0 %v388
    %701 = vmatpush1.msra.mxu0 %v387
    %702 = vmatprep.subr.mxu0 %v391
    %703 = vmatpush1.msra.mxu0 %v390
    %704 = vmatprep.subr.mxu0 %v394
    %705 = vmatpush1.msra.mxu0 %v393
    %706 = vmatprep.subr.mxu0 %v397
    %707 = vmatpush1.msra.mxu0 %v396
    %708 = vmatprep.subr.mxu0 %v400
    %709 = vmatpush1.msra.mxu0 %v399
    %710 = vmatprep.subr.mxu0 %v403
    %711 = vmatpush1.msra.mxu0 %v402
    %712 = vmatprep.subr.mxu0 %v406
    %713 = vmatpush1.msra.mxu0 %v405
    %714 = vmatprep.subr.mxu0 %v409
    %715 = vmatpush1.msra.mxu0 %v408
    %716 = vmatprep.subr.mxu0 %v412
    %717 = vmatpush1.msra.mxu0 %v411
    %718 = vmatprep.subr.mxu0 %v415
    %719 = vmatpush1.msra.mxu0 %v414
    %720 = vmatprep.subr.mxu0 %v418
    %721 = vmatpush1.msra.mxu0 %v417
    %722 = vmatprep.subr.mxu0 %v421
    %723 = vmatpush1.msra.mxu0 %v420
    %724 = vmatprep.subr.mxu0 %v424
    %725 = vmatpush1.msra.mxu0 %v423
    %726 = vmatprep.subr.mxu0 %v427
    %727 = vmatpush1.msra.mxu0 %v426
    %728 = vmatprep.subr.mxu0 %v430
    %729 = vmatpush1.msra.mxu0 %v429
    %730 = vmatprep.subr.mxu0 %v433
    %731 = vmatpush1.msra.mxu0 %v432
    %732 = vmatprep.subr.mxu0 %v436
    %733 = vmatpush1.msra.mxu0 %v435
    %734 = vmatprep.subr.mxu0 %v439
    %735 = vmatpush1.msra.mxu0 %v438
    %736 = vmatprep.subr.mxu0 %v442
    %737 = vmatpush1.msra.mxu0 %v441
    %738 = vmatprep.mubr.f32.mxu0 %v59
    %739 = vmatmul.mubr.f32.gmra.mrb[0].mxu0 %v58
    %v740 = vpop.f32.mrb[0].mxu0
    %v741 = vadd.f32 %v670, %v740
    %v742 = vpop.f32.mrb[0].mxu0
    %v743 = vadd.f32 %v672, %v742
    %744 = vdwg.mxu0
    %745 = vmatprep.subr.mxu0 0.0
    %746 = vmatpush1.msra.mxu0 %v62
    %747 = vmatprep.subr.mxu0 0.0
    %748 = vmatpush1.msra.mxu0 %v65
    %749 = vmatprep.subr.mxu0 0.0
    %750 = vmatpush1.msra.mxu0 %v68
    %751 = vmatprep.subr.mxu0 0.0
    %752 = vmatpush1.msra.mxu0 %v71
    %753 = vmatprep.subr.mxu0 0.0
    %754 = vmatpush1.msra.mxu0 %v74
    %755 = vmatprep.subr.mxu0 0.0
    %756 = vmatpush1.msra.mxu0 %v77
    %757 = vmatprep.subr.mxu0 0.0
    %758 = vmatpush1.msra.mxu0 %v80
    %759 = vmatprep.subr.mxu0 0.0
    %760 = vmatpush1.msra.mxu0 %v83
    %761 = vmatprep.subr.mxu0 0.0
    %762 = vmatpush1.msra.mxu0 %v86
    %763 = vmatprep.subr.mxu0 0.0
    %764 = vmatpush1.msra.mxu0 %v89
    %765 = vmatprep.subr.mxu0 0.0
    %766 = vmatpush1.msra.mxu0 %v92
    %767 = vmatprep.subr.mxu0 0.0
    %768 = vmatpush1.msra.mxu0 %v95
    %769 = vmatprep.subr.mxu0 0.0
    %770 = vmatpush1.msra.mxu0 %v98
    %771 = vmatprep.subr.mxu0 0.0
    %772 = vmatpush1.msra.mxu0 %v101
    %773 = vmatprep.subr.mxu0 0.0
    %774 = vmatpush1.msra.mxu0 %v104
    %775 = vmatprep.subr.mxu0 0.0
    %776 = vmatpush1.msra.mxu0 %v107
    %777 = vmatprep.subr.mxu0 0.0
    %778 = vmatpush1.msra.mxu0 %v110
    %779 = vmatprep.subr.mxu0 0.0
    %780 = vmatpush1.msra.mxu0 %v113
    %781 = vmatprep.subr.mxu0 0.0
    %782 = vmatpush1.msra.mxu0 %v116
    %783 = vmatprep.subr.mxu0 0.0
    %784 = vmatpush1.msra.mxu0 %v119
    %785 = vmatprep.subr.mxu0 0.0
    %786 = vmatpush1.msra.mxu0 %v122
    %787 = vmatprep.subr.mxu0 0.0
    %788 = vmatpush1.msra.mxu0 %v125
    %789 = vmatprep.subr.mxu0 0.0
    %790 = vmatpush1.msra.mxu0 %v128
    %791 = vmatprep.subr.mxu0 0.0
    %792 = vmatpush1.msra.mxu0 %v131
    %793 = vmatprep.subr.mxu0 0.0
    %794 = vmatpush1.msra.mxu0 %v134
    %795 = vmatprep.subr.mxu0 0.0
    %796 = vmatpush1.msra.mxu0 %v137
    %797 = vmatprep.subr.mxu0 0.0
    %798 = vmatpush1.msra.mxu0 %v140
    %799 = vmatprep.subr.mxu0 0.0
    %800 = vmatpush1.msra.mxu0 %v143
    %801 = vmatprep.subr.mxu0 0.0
    %802 = vmatpush1.msra.mxu0 %v146
    %803 = vmatprep.subr.mxu0 0.0
    %804 = vmatpush1.msra.mxu0 %v149
    %805 = vmatprep.subr.mxu0 0.0
    %806 = vmatpush1.msra.mxu0 %v152
    %807 = vmatprep.subr.mxu0 0.0
    %808 = vmatpush1.msra.mxu0 %v155
    %809 = vmatprep.mubr.f32.mxu0 %v53
    %810 = vmatmul.mubr.f32.gmra.mrb[0].mxu0 %v52
    %v811 = vpop.f32.mrb[0].mxu0
    %v812 = vadd.f32 %v457, %v811
    %v813 = vpop.f32.mrb[0].mxu0
    %814 = vdwg.mxu0
    %815 = vmatprep.subr.mxu0 0.0
    %816 = vmatpush1.msra.mxu0 %v158
    %817 = vmatprep.subr.mxu0 0.0
    %818 = vmatpush1.msra.mxu0 %v161
    %819 = vmatprep.subr.mxu0 0.0
    %820 = vmatpush1.msra.mxu0 %v164
    %821 = vmatprep.subr.mxu0 0.0
    %822 = vmatpush1.msra.mxu0 %v167
    %823 = vmatprep.subr.mxu0 0.0
    %824 = vmatpush1.msra.mxu0 %v170
    %825 = vmatprep.subr.mxu0 0.0
    %826 = vmatpush1.msra.mxu0 %v173
    %827 = vmatprep.subr.mxu0 0.0
    %828 = vmatpush1.msra.mxu0 %v176
    %829 = vmatprep.subr.mxu0 0.0
    %830 = vmatpush1.msra.mxu0 %v179
    %831 = vmatprep.subr.mxu0 0.0
    %832 = vmatpush1.msra.mxu0 %v182
    %833 = vmatprep.subr.mxu0 0.0
    %834 = vmatpush1.msra.mxu0 %v185
    %835 = vmatprep.subr.mxu0 0.0
    %836 = vmatpush1.msra.mxu0 %v188
    %837 = vmatprep.subr.mxu0 0.0
    %838 = vmatpush1.msra.mxu0 %v191
    %839 = vmatprep.subr.mxu0 0.0
    %840 = vmatpush1.msra.mxu0 %v194
    %841 = vmatprep.subr.mxu0 0.0
    %842 = vmatpush1.msra.mxu0 %v197
    %843 = vmatprep.subr.mxu0 0.0
    %844 = vmatpush1.msra.mxu0 %v200
    %845 = vmatprep.subr.mxu0 0.0
    %846 = vmatpush1.msra.mxu0 %v203
    %847 = vmatprep.subr.mxu0 0.0
    %848 = vmatpush1.msra.mxu0 %v206
    %849 = vmatprep.subr.mxu0 0.0
    %850 = vmatpush1.msra.mxu0 %v209
    %851 = vmatprep.subr.mxu0 0.0
    %852 = vmatpush1.msra.mxu0 %v212
    %853 = vmatprep.subr.mxu0 0.0
    %854 = vmatpush1.msra.mxu0 %v215
    %855 = vmatprep.subr.mxu0 0.0
    %856 = vmatpush1.msra.mxu0 %v218
    %857 = vmatprep.subr.mxu0 0.0
    %858 = vmatpush1.msra.mxu0 %v221
    %859 = vmatprep.subr.mxu0 0.0
    %860 = vmatpush1.msra.mxu0 %v224
    %861 = vmatprep.subr.mxu0 0.0
    %862 = vmatpush1.msra.mxu0 %v227
    %863 = vmatprep.subr.mxu0 0.0
    %864 = vmatpush1.msra.mxu0 %v230
    %865 = vmatprep.subr.mxu0 0.0
    %866 = vmatpush1.msra.mxu0 %v233
    %867 = vmatprep.subr.mxu0 0.0
    %868 = vmatpush1.msra.mxu0 %v236
    %869 = vmatprep.subr.mxu0 0.0
    %870 = vmatpush1.msra.mxu0 %v239
    %871 = vmatprep.subr.mxu0 0.0
    %872 = vmatpush1.msra.mxu0 %v242
    %873 = vmatprep.subr.mxu0 0.0
    %874 = vmatpush1.msra.mxu0 %v245
    %875 = vmatprep.subr.mxu0 0.0
    %876 = vmatpush1.msra.mxu0 %v248
    %877 = vmatprep.subr.mxu0 0.0
    %878 = vmatpush1.msra.mxu0 %v251
    %879 = vmatprep.mubr.f32.mxu0 %v55
    %880 = vmatmul.mubr.f32.gmra.mrb[0].mxu0 %v54
    %v881 = vpop.f32.mrb[0].mxu0
    %v882 = vadd.f32 %v812, %v881
    %v883 = vpop.f32.mrb[0].mxu0
    %884 = vdwg.mxu0
    %885 = vmatprep.subr.mxu0 0.0
    %886 = vmatpush1.msra.mxu0 %v254
    %887 = vmatprep.subr.mxu0 0.0
    %888 = vmatpush1.msra.mxu0 %v257
    %889 = vmatprep.subr.mxu0 0.0
    %890 = vmatpush1.msra.mxu0 %v260
    %891 = vmatprep.subr.mxu0 0.0
    %892 = vmatpush1.msra.mxu0 %v263
    %893 = vmatprep.subr.mxu0 0.0
    %894 = vmatpush1.msra.mxu0 %v266
    %895 = vmatprep.subr.mxu0 0.0
    %896 = vmatpush1.msra.mxu0 %v269
    %897 = vmatprep.subr.mxu0 0.0
    %898 = vmatpush1.msra.mxu0 %v272
    %899 = vmatprep.subr.mxu0 0.0
    %900 = vmatpush1.msra.mxu0 %v275
    %901 = vmatprep.subr.mxu0 0.0
    %902 = vmatpush1.msra.mxu0 %v278
    %903 = vmatprep.subr.mxu0 0.0
    %904 = vmatpush1.msra.mxu0 %v281
    %905 = vmatprep.subr.mxu0 0.0
    %906 = vmatpush1.msra.mxu0 %v284
    %907 = vmatprep.subr.mxu0 0.0
    %908 = vmatpush1.msra.mxu0 %v287
    %909 = vmatprep.subr.mxu0 0.0
    %910 = vmatpush1.msra.mxu0 %v290
    %911 = vmatprep.subr.mxu0 0.0
    %912 = vmatpush1.msra.mxu0 %v293
    %913 = vmatprep.subr.mxu0 0.0
    %914 = vmatpush1.msra.mxu0 %v296
    %915 = vmatprep.subr.mxu0 0.0
    %916 = vmatpush1.msra.mxu0 %v299
    %917 = vmatprep.subr.mxu0 0.0
    %918 = vmatpush1.msra.mxu0 %v302
    %919 = vmatprep.subr.mxu0 0.0
    %920 = vmatpush1.msra.mxu0 %v305
    %921 = vmatprep.subr.mxu0 0.0
    %922 = vmatpush1.msra.mxu0 %v308
    %923 = vmatprep.subr.mxu0 0.0
    %924 = vmatpush1.msra.mxu0 %v311
    %925 = vmatprep.subr.mxu0 0.0
    %926 = vmatpush1.msra.mxu0 %v314
    %927 = vmatprep.subr.mxu0 0.0
    %928 = vmatpush1.msra.mxu0 %v317
    %929 = vmatprep.subr.mxu0 0.0
    %930 = vmatpush1.msra.mxu0 %v320
    %931 = vmatprep.subr.mxu0 0.0
    %932 = vmatpush1.msra.mxu0 %v323
    %933 = vmatprep.subr.mxu0 0.0
    %934 = vmatpush1.msra.mxu0 %v326
    %935 = vmatprep.subr.mxu0 0.0
    %936 = vmatpush1.msra.mxu0 %v329
    %937 = vmatprep.subr.mxu0 0.0
    %938 = vmatpush1.msra.mxu0 %v332
    %939 = vmatprep.subr.mxu0 0.0
    %940 = vmatpush1.msra.mxu0 %v335
    %941 = vmatprep.subr.mxu0 0.0
    %942 = vmatpush1.msra.mxu0 %v338
    %943 = vmatprep.subr.mxu0 0.0
    %944 = vmatpush1.msra.mxu0 %v341
    %945 = vmatprep.subr.mxu0 0.0
    %946 = vmatpush1.msra.mxu0 %v344
    %947 = vmatprep.subr.mxu0 0.0
    %948 = vmatpush1.msra.mxu0 %v347
    %949 = vmatprep.mubr.f32.mxu0 %v57
    %950 = vmatmul.mubr.f32.gmra.mrb[0].mxu0 %v56
    %v951 = vpop.f32.mrb[0].mxu0
    %v952 = vadd.f32 %v882, %v951
    %v953 = vpop.f32.mrb[0].mxu0
    %954 = vdwg.mxu0
    %955 = vmatprep.subr.mxu0 0.0
    %956 = vmatpush1.msra.mxu0 %v350
    %957 = vmatprep.subr.mxu0 0.0
    %958 = vmatpush1.msra.mxu0 %v353
    %959 = vmatprep.subr.mxu0 0.0
    %960 = vmatpush1.msra.mxu0 %v356
    %961 = vmatprep.subr.mxu0 0.0
    %962 = vmatpush1.msra.mxu0 %v359
    %963 = vmatprep.subr.mxu0 0.0
    %964 = vmatpush1.msra.mxu0 %v362
    %965 = vmatprep.subr.mxu0 0.0
    %966 = vmatpush1.msra.mxu0 %v365
    %967 = vmatprep.subr.mxu0 0.0
    %968 = vmatpush1.msra.mxu0 %v368
    %969 = vmatprep.subr.mxu0 0.0
    %970 = vmatpush1.msra.mxu0 %v371
    %971 = vmatprep.subr.mxu0 0.0
    %972 = vmatpush1.msra.mxu0 %v374
    %973 = vmatprep.subr.mxu0 0.0
    %974 = vmatpush1.msra.mxu0 %v377
    %975 = vmatprep.subr.mxu0 0.0
    %976 = vmatpush1.msra.mxu0 %v380
    %977 = vmatprep.subr.mxu0 0.0
    %978 = vmatpush1.msra.mxu0 %v383
    %979 = vmatprep.subr.mxu0 0.0
    %980 = vmatpush1.msra.mxu0 %v386
    %981 = vmatprep.subr.mxu0 0.0
    %982 = vmatpush1.msra.mxu0 %v389
    %983 = vmatprep.subr.mxu0 0.0
    %984 = vmatpush1.msra.mxu0 %v392
    %985 = vmatprep.subr.mxu0 0.0
    %986 = vmatpush1.msra.mxu0 %v395
    %987 = vmatprep.subr.mxu0 0.0
    %988 = vmatpush1.msra.mxu0 %v398
    %989 = vmatprep.subr.mxu0 0.0
    %990 = vmatpush1.msra.mxu0 %v401
    %991 = vmatprep.subr.mxu0 0.0
    %992 = vmatpush1.msra.mxu0 %v404
    %993 = vmatprep.subr.mxu0 0.0
    %994 = vmatpush1.msra.mxu0 %v407
    %995 = vmatprep.subr.mxu0 0.0
    %996 = vmatpush1.msra.mxu0 %v410
    %997 = vmatprep.subr.mxu0 0.0
    %998 = vmatpush1.msra.mxu0 %v413
    %999 = vmatprep.subr.mxu0 0.0
    %1000 = vmatpush1.msra.mxu0 %v416
    %1001 = vmatprep.subr.mxu0 0.0
    %1002 = vmatpush1.msra.mxu0 %v419
    %1003 = vmatprep.subr.mxu0 0.0
    %1004 = vmatpush1.msra.mxu0 %v422
    %1005 = vmatprep.subr.mxu0 0.0
    %1006 = vmatpush1.msra.mxu0 %v425
    %1007 = vmatprep.subr.mxu0 0.0
    %1008 = vmatpush1.msra.mxu0 %v428
    %1009 = vmatprep.subr.mxu0 0.0
    %1010 = vmatpush1.msra.mxu0 %v431
    %1011 = vmatprep.subr.mxu0 0.0
    %1012 = vmatpush1.msra.mxu0 %v434
    %1013 = vmatprep.subr.mxu0 0.0
    %1014 = vmatpush1.msra.mxu0 %v437
    %1015 = vmatprep.subr.mxu0 0.0
    %1016 = vmatpush1.msra.mxu0 %v440
    %1017 = vmatprep.subr.mxu0 0.0
    %1018 = vmatpush1.msra.mxu0 %v443
    %1019 = vmatprep.mubr.f32.mxu0 %v59
    %1020 = vmatmul.mubr.f32.gmra.mrb[0].mxu0 %v58
    %v1021 = vpop.f32.mrb[0].mxu0
    %v1022 = vadd.f32 %v952, %v1021
    %v1023 = vpop.f32.mrb[0].mxu0
    %1024 = vdwg.mxu0
    %1025 = vmax.xlane.f32.xlu0 %v741
    %v1026 = vpop.xlane.xlu0 %1025
    %v1027 = vsub.f32 %v741, %v1026
    %v1028 = vmul.f32 %v1027, 1.442695
    %v1029 = vpow.pop %v1028
    %1030 = vadd.xlane.f32.xlu0 %v1029
    %v1031 = vpop.xlane.xlu0 %1030
    %v1032 = vrcp.pop %v1031
    %v1033 = vmul.f32 %v1029, %v1032
    %v1034 = vadd.f32 %v1033, 0.0
    %1035 = vmax.xlane.f32.xlu0 %v743
    %v1036 = vpop.xlane.xlu0 %1035
    %v1037 = vsub.f32 %v743, %v1036
    %v1038 = vmul.f32 %v1037, 1.442695
    %v1039 = vpow.pop %v1038
    %1040 = vadd.xlane.f32.xlu0 %v1039
    %v1041 = vpop.xlane.xlu0 %1040
    %v1042 = vrcp.pop %v1041
    %v1043 = vmul.f32 %v1039, %v1042
    %v1044 = vadd.f32 %v1034, %v1043
    %1045 = vmax.xlane.f32.xlu0 %v1022
    %v1046 = vpop.xlane.xlu0 %1045
    %v1047 = vsub.f32 %v1022, %v1046
    %v1048 = vmul.f32 %v1047, 1.442695
    %v1049 = vpow.pop %v1048
    %1050 = vadd.xlane.f32.xlu0 %v1049
    %v1051 = vpop.xlane.xlu0 %1050
    %v1052 = vrcp.pop %v1051
    %v1053 = vmul.f32 %v1049, %v1052
    %v1054 = vadd.f32 %v1044, %v1053
    %v1055 = vmul.f32 %v1054, 0.33333334
    %1056 = vst [vmem:[#allocation8] sm:$0xff] %v1055
    // Predicated region
    $region26: #{tpu_custom_call.1} parent=1 // pred_check
      _
    $region27: #{tpu_custom_call.1} parent=1 // pred_check_branch
      %1058 = sbr.rel (0) target = $region29
    $region28: #{tpu_custom_call.1} parent=1 // pred_region
      %s1060 = ssub.s32 128, 128
      %1061 = vsyncadd [#allocation4], %s1060
      %s1063 = sshll.u32 [#allocation8], 4
      %s1064 = int_to_ptr.vmem [resolvable:$true] %s1063
      %1066 = dma.vmem_to_hbm [thread:$0]  %s1064, 128, %s3, [#allocation4]
    $region29: #{tpu_custom_call.1} parent=1 // pred_fallthru
      _
    // Predicated region
    $region30: #{tpu_custom_call.1} parent=1 // pred_check
      _
    $region31: #{tpu_custom_call.1} parent=1 // pred_check_branch
      %1068 = sbr.rel (0) target = $region33
    $region32: #{tpu_custom_call.1} parent=1 // pred_region
      %1069 = dma.done [#allocation4], 128
    $region33: #{tpu_custom_call.1} parent=1 // pred_fallthru
      _
    %1070 = vsyncpa [#allocation3], 1
    %1071 = vsyncpa [#allocation6], 1
    %1072 = vsyncpa [#allocation4], 1

</llo_original>
